<compile_context>
chip_gen: v6e
topology: v6e:2x2x1
jax: 0.10.0
libtpu: 0.0.40
codegen_flags: <defaults>
</compile_context>

<pallas_src>
import functools
import math

import jax
import jax.numpy as jnp
from jax.experimental import pallas as pl
from jax.experimental.pallas import tpu as pltpu


def _round_up(x, m):
    return (x + m - 1) // m * m


def _vmem_capacity_bytes():
    """Per-core VMEM capacity; conservative 64 MiB fallback (v7x per-TC)."""
    try:
        cap = getattr(pltpu.get_tpu_info(), "vmem_capacity_bytes", None)
        if cap:
            return int(cap)
    except Exception:
        pass
    return 64 << 20


def _choose_tiles(B, K, N, in_sz, out_sz, budget):
    """Pick (tm, tn): whole (padded) feature slab VMEM-resident when it fits."""
    row_mult = 16 if in_sz == 2 else 8
    if N % 128 == 0:
        tn_cands = [c for c in (512, 256, 128) if N % c == 0]
    else:
        tn_cands = [256, 128]
    m_full = _round_up(B, row_mult)
    tm_cands = [m_full] + [t for t in (2048, 1024, 512, 256, 128) if t < m_full]
    for tm in tm_cands:
        for tn in tn_cands:
            # Conservative: count every operand/output tile as double-buffered.
            need = 2 * (tm * K * in_sz + K * tn * in_sz + tm * tn * out_sz + tm * 4)
            if need <= budget:
                return tm, tn, need
    tm, tn = tm_cands[-1], tn_cands[-1]
    need = 2 * (tm * K * in_sz + K * tn * in_sz + tm * tn * out_sz + tm * 4)
    return tm, tn, need


def arcface_kernel(labels_ref, f_ref, wt_ref, o_ref, *, scale, cos_m_scaled,
                   sin_m_scaled, tn):
    # Column-block index (slow grid axis); read at kernel top level only.
    j = pl.program_id(0)

    cos_theta = jnp.dot(f_ref[...], wt_ref[...],
                        preferred_element_type=jnp.float32)
    cos_theta = jnp.clip(cos_theta, -1.0, 1.0)
    # cos(acos(c) + m) = c*cos(m) - sqrt(1 - c^2)*sin(m), exact for c in [-1, 1].
    sin_theta = jnp.sqrt(jnp.maximum(1.0 - cos_theta * cos_theta, 0.0))
    # Scale is folded into the constants / non-target branch (no trailing *scale).
    target_scaled = cos_theta * cos_m_scaled - sin_theta * sin_m_scaled
    cos_scaled = cos_theta * scale

    # Localize labels on the (tm, 1) vector; compare against a raw lane iota
    # (avoids a full-tile `+ j*tn` add). Padded rows carry label = -1.
    labels_local = labels_ref[...] - j * tn
    col_ids = jax.lax.broadcasted_iota(jnp.int32, cos_theta.shape, 1)
    one_hot = col_ids == labels_local
    o_ref[...] = jnp.where(one_hot, target_scaled, cos_scaled).astype(o_ref.dtype)


def arcface_logits(features, weight_t, labels, *, scale=64.0, margin=0.5,
                   compute_dtype=jnp.bfloat16, out_dtype=jnp.float32):
    """Fused ArcFace logits.

    features: [B, K] float. weight_t: [K, N] float (weight stored pre-transposed).
    labels: [B] int class indices. Returns logits [B, N] in `out_dtype`.

    Note: operands are cast to `compute_dtype` (bf16 by default) before the MXU
    matmul; accumulation and the epilogue stay in f32. Pass
    compute_dtype=jnp.float32 for bit-closer parity with the f32 PyTorch module.
    """
    B, K = features.shape
    K2, N = weight_t.shape
    assert K == K2, (K, K2)

    in_sz = jnp.dtype(compute_dtype).itemsize
    out_sz = jnp.dtype(out_dtype).itemsize
    vmem_cap = _vmem_capacity_bytes()
    tm, tn, need = _choose_tiles(B, K, N, in_sz, out_sz, int(vmem_cap * 0.75))

    m_pad = _round_up(B, tm)
    n_pad = _round_up(N, tn)

    f = features.astype(compute_dtype)
    w = weight_t.astype(compute_dtype)
    if m_pad != B:
        f = jnp.pad(f, ((0, m_pad - B), (0, 0)))
    if n_pad != N:
        w = jnp.pad(w, ((0, 0), (0, n_pad - N)))
    labels2d = jnp.pad(labels.astype(jnp.int32).reshape(B, 1),
                       ((0, m_pad - B), (0, 0)), constant_values=-1)

    kernel = functools.partial(
        arcface_kernel,
        scale=float(scale),
        cos_m_scaled=float(math.cos(margin) * scale),
        sin_m_scaled=float(math.sin(margin) * scale),
        tn=tn,
    )

    n_tiles = n_pad // tn
    m_tiles = m_pad // tm
    vmem_limit = int(min(vmem_cap, max(32 << 20, need + (4 << 20))))
    feat_fetches = n_tiles if m_tiles > 1 else 1   # constant index -> fetched once

    out = pl.pallas_call(
        kernel,
        out_shape=jax.ShapeDtypeStruct((m_pad, n_pad), out_dtype),
        # Slow axis = class-column tiles -> each weight block is DMA'd exactly
        # once; fast axis = row tiles (small, usually one resident block).
        grid=(n_tiles, m_tiles),
        in_specs=[
            pl.BlockSpec((tm, 1), lambda jn, im: (im, 0)),   # labels
            pl.BlockSpec((tm, K), lambda jn, im: (im, 0)),   # features (full K)
            pl.BlockSpec((K, tn), lambda jn, im: (0, jn)),   # weight^T (full K)
        ],
        out_specs=pl.BlockSpec((tm, tn), lambda jn, im: (im, jn)),
        compiler_params=pltpu.CompilerParams(
            dimension_semantics=("parallel", "parallel"),
            vmem_limit_bytes=vmem_limit,
        ),
        cost_estimate=pl.CostEstimate(
            flops=2 * m_pad * n_pad * K,
            bytes_accessed=(in_sz * K * n_pad                  # weight, once
                            + in_sz * m_pad * K * feat_fetches  # features
                            + 4 * m_pad * n_tiles               # labels
                            + out_sz * m_pad * n_pad),          # output
            transcendentals=m_pad * n_pad,                      # sqrt on the EUP
        ),
    )(labels2d, f, w)

    # Column padding is avoided whenever a 128-multiple tile divides N; a
    # contiguous row-prefix slice is cheap (and skipped when B is aligned).
    if n_pad != N:
        out = out[:, :N]
    if m_pad != B:
        out = out[:B]
    return out


if __name__ == "__main__":
    B, in_features, out_features = 8, 256, 256
    scale, margin = 64.0, 0.5

    key = jax.random.PRNGKey(0)
    k_w, k_f, k_l = jax.random.split(key, 3)

    # Deterministic xavier_uniform_ init, torch layout (out_features, in_features).
    bound = math.sqrt(6.0 / (in_features + out_features))
    weight = jax.random.uniform(
        k_w, (out_features, in_features), jnp.float32, -bound, bound)
    # Store the weight pre-transposed once (not per forward call).
    weight_t = weight.T

    # L2-normalized features (typical ArcFace usage; keeps cos_theta well-scaled).
    feats = jax.random.normal(k_f, (B, in_features), jnp.float32)
    feats = feats / jnp.linalg.norm(feats, axis=1, keepdims=True)
    labels = jax.random.randint(k_l, (B,), 0, out_features, jnp.int32)

    out = arcface_logits(feats, weight_t, labels, scale=scale, margin=margin)
    out = jax.block_until_ready(out)

    # Reference: same math as the PyTorch module, with the same bf16 rounding
    # applied to the operands the kernel uses (f32 accumulation/epilogue).
    fb = feats.astype(jnp.bfloat16).astype(jnp.float32)
    wb = weight.astype(jnp.bfloat16).astype(jnp.float32)
    cos_theta = jnp.clip(
        jnp.matmul(fb, wb.T, precision=jax.lax.Precision.HIGHEST), -1.0, 1.0)
    target = jnp.cos(jnp.arccos(cos_theta) + margin)
    one_hot = jax.nn.one_hot(labels, out_features, dtype=cos_theta.dtype)
    ref = (one_hot * target + (1.0 - one_hot) * cos_theta) * scale

    assert out.shape == (B, out_features)
    assert jnp.allclose(out, ref, atol=2e-3, rtol=2e-3), float(
        jnp.max(jnp.abs(out - ref)))

    print("KERNEL_OK")
</pallas_src>

<mosaic_0001>
module attributes {stable_mosaic.version = 11 : i64} {
  func.func @arcface_kernel(%arg0: i32, %arg1: i32, %arg2: memref<16x1xi32, #tpu.memory_space<vmem>>, %arg3: memref<16x256xbf16, #tpu.memory_space<vmem>>, %arg4: memref<256x256xbf16, #tpu.memory_space<vmem>>, %arg5: memref<16x256xf32, #tpu.memory_space<vmem>>) attributes {dimension_semantics = [#tpu.dimension_semantics<parallel>, #tpu.dimension_semantics<parallel>], iteration_bounds = array<i64: 1, 1>, scalar_prefetch = 0 : i64, scratch_operands = 0 : i64, tpu.core_type = #tpu.core_type<tc>, window_params = [{transform_indices = @transform_0, window_bounds = array<i64: 16, 1>}, {transform_indices = @transform_1, window_bounds = array<i64: 16, 256>}, {transform_indices = @transform_2, window_bounds = array<i64: 256, 256>}, {transform_indices = @transform_3, window_bounds = array<i64: 16, 256>}]} {
    %c0 = arith.constant 0 : index
    %c0_0 = arith.constant 0 : index
    %0 = vector.load %arg3[%c0, %c0_0] : memref<16x256xbf16, #tpu.memory_space<vmem>>, vector<16x256xbf16>
    %c0_1 = arith.constant 0 : index
    %c0_2 = arith.constant 0 : index
    %1 = vector.load %arg4[%c0_1, %c0_2] : memref<256x256xbf16, #tpu.memory_space<vmem>>, vector<256x256xbf16>
    %cst = arith.constant dense<0.000000e+00> : vector<16x256xf32>
    %2 = tpu.matmul %0, %1, %cst {dimension_numbers = #tpu.dot_dimension_numbers<[1], [0], [0], [1], [0, 0, 1, 1], [], []>} : vector<16x256xbf16>, vector<256x256xbf16>, vector<16x256xf32> -> vector<16x256xf32>
    %cst_3 = arith.constant -1.000000e+00 : f32
    %cst_4 = arith.constant 1.000000e+00 : f32
    %3 = vector.broadcast %cst_3 : f32 to vector<16x256xf32>
    %4 = arith.maximumf %3, %2 : vector<16x256xf32>
    %5 = vector.broadcast %cst_4 : f32 to vector<16x256xf32>
    %6 = arith.minimumf %5, %4 : vector<16x256xf32>
    %7 = arith.mulf %6, %6 : vector<16x256xf32>
    %cst_5 = arith.constant 1.000000e+00 : f32
    %8 = vector.broadcast %cst_5 : f32 to vector<16x256xf32>
    %9 = arith.subf %8, %7 : vector<16x256xf32>
    %cst_6 = arith.constant 0.000000e+00 : f32
    %10 = vector.broadcast %cst_6 : f32 to vector<16x256xf32>
    %11 = arith.maximumf %9, %10 : vector<16x256xf32>
    %12 = math.sqrt %11 : vector<16x256xf32>
    %cst_7 = arith.constant 56.1652832 : f32
    %13 = vector.broadcast %cst_7 : f32 to vector<16x256xf32>
    %14 = arith.mulf %6, %13 : vector<16x256xf32>
    %cst_8 = arith.constant 30.6832352 : f32
    %15 = vector.broadcast %cst_8 : f32 to vector<16x256xf32>
    %16 = arith.mulf %12, %15 : vector<16x256xf32>
    %17 = arith.subf %14, %16 : vector<16x256xf32>
    %cst_9 = arith.constant 6.400000e+01 : f32
    %18 = vector.broadcast %cst_9 : f32 to vector<16x256xf32>
    %19 = arith.mulf %6, %18 : vector<16x256xf32>
    %c0_10 = arith.constant 0 : index
    %c0_11 = arith.constant 0 : index
    %20 = vector.load %arg2[%c0_10, %c0_11] : memref<16x1xi32, #tpu.memory_space<vmem>>, vector<16x1xi32>
    %c256_i32 = arith.constant 256 : i32
    %21 = arith.muli %arg0, %c256_i32 : i32
    %22 = vector.broadcast %21 : i32 to vector<16x1xi32>
    %23 = arith.subi %20, %22 : vector<16x1xi32>
    %24 = tpu.iota {dimensions = array<i32: 1>} : vector<16x256xi32>
    %25 = vector.broadcast %23 : vector<16x1xi32> to vector<16x256xi32>
    %26 = arith.cmpi eq, %24, %25 : vector<16x256xi32>
    %27 = arith.select %26, %17, %19 : vector<16x256xi1>, vector<16x256xf32>
    %c0_12 = arith.constant 0 : index
    %c0_13 = arith.constant 0 : index
    %28 = vector.load %arg5[%c0_12, %c0_13] : memref<16x256xf32, #tpu.memory_space<vmem>>, vector<16x256xf32>
    tpu.vector_store %arg5[%c0_12, %c0_13], %27 {strides = array<i32>} : memref<16x256xf32, #tpu.memory_space<vmem>>, vector<16x256xf32>,
    return
  }
  func.func @transform_0(%arg0: i32, %arg1: i32) -> (i32, i32) {
    %c0_i32 = arith.constant 0 : i32
    %c0_i32_0 = arith.constant 0 : i32
    return %arg1, %c0_i32 : i32, i32
  }
  func.func @transform_1(%arg0: i32, %arg1: i32) -> (i32, i32) {
    %c0_i32 = arith.constant 0 : i32
    %c0_i32_0 = arith.constant 0 : i32
    return %arg1, %c0_i32 : i32, i32
  }
  func.func @transform_2(%arg0: i32, %arg1: i32) -> (i32, i32) {
    %c0_i32 = arith.constant 0 : i32
    %c0_i32_0 = arith.constant 0 : i32
    return %c0_i32, %arg0 : i32, i32
  }
  func.func @transform_3(%arg0: i32, %arg1: i32) -> (i32, i32) {
    %c0_i32 = arith.constant 0 : i32
    return %arg1, %arg0 : i32, i32
  }
}

</mosaic_0001>

<llo_original>
// kernel: tpu_custom_call.1
$region0: #{tpu_custom_call.1}
  #allocation0 [shape = 'u32[]', space=smem, size = 0x4, offset = 0x4, fixed_abs, tag = 'smem constant byte address 0x4 - core index']
  #allocation1 [shape = 'u32[144,128]{1,0:T(1,128)}', space=vmem, size = 0x12000, scoped, tag = 'internal scratch']
  %s0 = inlined_call_operand.vmem [shape: s32[16,1], index: 0, kind: input, shape index: {}]
  %s1 = inlined_call_operand.vmem [shape: bf16[16,256], index: 1, kind: input, shape index: {}]
  %s2 = inlined_call_operand.hbm [shape: bf16[256,256], index: 2, kind: input, shape index: {}]
  %s3 = inlined_call_operand.hbm [shape: f32[16,256], index: 3, kind: output, shape index: {}]
  %s4 = sld [smem:[#allocation0]]
  $region26: #{tpu_custom_call.1} parent=0
    _
  %s6 = ssub.s32 1, %s4
  %s7 = scalar_select 0, %s6, %s4
  $region1: #{tpu_custom_call.1} parent=0
    #allocation2 [shape = 'u8[131072]{0}', space=vmem, size = 0x20000, scoped, tag = 'input window, operand 2, single buffered']
    #allocation3 [shape = 's32[1]{0}', space=sflag, size = 0x4, scoped, tag = 'scoped memory for tpu_custom_call.1']
    #allocation4 [shape = 's32[1]{0}', space=sflag, size = 0x4, scoped, tag = 'scoped memory for tpu_custom_call.1']
    #allocation5 [shape = 'u8[16384]{0}', space=vmem, size = 0x4000, scoped, tag = 'output window, operand 0, single buffered']
    %8 = vsyncpa [#allocation3], 0
    %9 = vsyncpa [#allocation4], 0
    // Predicated region
    $region2: #{tpu_custom_call.1} parent=1 // pred_check
      _
    $region3: #{tpu_custom_call.1} parent=1 // pred_check_branch
      %11 = sbr.rel (0) target = $region5
    $region4: #{tpu_custom_call.1} parent=1 // pred_region
      _
    $region5: #{tpu_custom_call.1} parent=1 // pred_fallthru
      _
    // Predicated region
    $region6: #{tpu_custom_call.1} parent=1 // pred_check
      _
    $region7: #{tpu_custom_call.1} parent=1 // pred_check_branch
      %13 = sbr.rel (0) target = $region9
    $region8: #{tpu_custom_call.1} parent=1 // pred_region
      _
    $region9: #{tpu_custom_call.1} parent=1 // pred_fallthru
      _
    // Predicated region
    $region10: #{tpu_custom_call.1} parent=1 // pred_check
      _
    $region11: #{tpu_custom_call.1} parent=1 // pred_check_branch
      %15 = sbr.rel (0) target = $region13
    $region12: #{tpu_custom_call.1} parent=1 // pred_region
      %s17 = ssub.s32 4096, 4096
      %18 = vsyncadd [#allocation3], %s17
      %s19 = sshll.u32 [#allocation2], 4
      %s20 = int_to_ptr.vmem [resolvable:$true] %s19
      %25 = dma.hbm_to_vmem [thread:$0]  %s2, 4096, %s20, [#allocation3], 128, 128, 8
    $region13: #{tpu_custom_call.1} parent=1 // pred_fallthru
      _
    // Predicated region
    $region14: #{tpu_custom_call.1} parent=1 // pred_check
      _
    $region15: #{tpu_custom_call.1} parent=1 // pred_check_branch
      %27 = sbr.rel (0) target = $region17
    $region16: #{tpu_custom_call.1} parent=1 // pred_region
      %28 = dma.done [#allocation3], 4096
    $region17: #{tpu_custom_call.1} parent=1 // pred_fallthru
      _
    %v29 = vld [vmem:[%s1] sm:$0xff]
    %v30 = vld [vmem:[%s1 + $0x8] sm:$0xff]
    %v31 = vld [vmem:[#allocation2] sm:$0xff]
    %v32 = vld [vmem:[#allocation2 + $0x8] sm:$0xff]
    %v33 = vld [vmem:[#allocation2 + $0x10] sm:$0xff]
    %v34 = vld [vmem:[#allocation2 + $0x18] sm:$0xff]
    %v35 = vld [vmem:[#allocation2 + $0x20] sm:$0xff]
    %v36 = vld [vmem:[#allocation2 + $0x28] sm:$0xff]
    %v37 = vld [vmem:[#allocation2 + $0x30] sm:$0xff]
    %v38 = vld [vmem:[#allocation2 + $0x38] sm:$0xff]
    %v39 = vld [vmem:[#allocation2 + $0x40] sm:$0xff]
    %v40 = vld [vmem:[#allocation2 + $0x48] sm:$0xff]
    %v41 = vld [vmem:[#allocation2 + $0x50] sm:$0xff]
    %v42 = vld [vmem:[#allocation2 + $0x58] sm:$0xff]
    %v43 = vld [vmem:[#allocation2 + $0x60] sm:$0xff]
    %v44 = vld [vmem:[#allocation2 + $0x68] sm:$0xff]
    %v45 = vld [vmem:[#allocation2 + $0x70] sm:$0xff]
    %v46 = vld [vmem:[#allocation2 + $0x78] sm:$0xff]
    %v47 = vld [vmem:[#allocation2 + $0x80] sm:$0xff]
    %v48 = vld [vmem:[#allocation2 + $0x88] sm:$0xff]
    %v49 = vld [vmem:[#allocation2 + $0x90] sm:$0xff]
    %v50 = vld [vmem:[#allocation2 + $0x98] sm:$0xff]
    %v51 = vld [vmem:[#allocation2 + $0xa0] sm:$0xff]
    %v52 = vld [vmem:[#allocation2 + $0xa8] sm:$0xff]
    %v53 = vld [vmem:[#allocation2 + $0xb0] sm:$0xff]
    %v54 = vld [vmem:[#allocation2 + $0xb8] sm:$0xff]
    %v55 = vld [vmem:[#allocation2 + $0xc0] sm:$0xff]
    %v56 = vld [vmem:[#allocation2 + $0xc8] sm:$0xff]
    %v57 = vld [vmem:[#allocation2 + $0xd0] sm:$0xff]
    %v58 = vld [vmem:[#allocation2 + $0xd8] sm:$0xff]
    %v59 = vld [vmem:[#allocation2 + $0xe0] sm:$0xff]
    %v60 = vld [vmem:[#allocation2 + $0xe8] sm:$0xff]
    %v61 = vld [vmem:[#allocation2 + $0xf0] sm:$0xff]
    %v62 = vld [vmem:[#allocation2 + $0xf8] sm:$0xff]
    %v65 = vunpack.c.l.b16 %v29
    %v66 = vunpack.c.h.b16 %v29
    %v67 = vunpack.c.l.b16 %v30
    %v68 = vunpack.c.h.b16 %v30
    %v69 = vpack.c.b16 %v67, %v65
    %v70 = vpack.c.b16 %v68, %v66
    %v105 = vunpack.c.l.b16 %v31
    %v106 = vunpack.c.h.b16 %v31
    %v107 = vunpack.c.l.b16 %v32
    %v108 = vunpack.c.h.b16 %v32
    %v109 = vunpack.c.l.b16 %v33
    %v110 = vunpack.c.h.b16 %v33
    %v111 = vunpack.c.l.b16 %v34
    %v112 = vunpack.c.h.b16 %v34
    %v113 = vunpack.c.l.b16 %v35
    %v114 = vunpack.c.h.b16 %v35
    %v115 = vunpack.c.l.b16 %v36
    %v116 = vunpack.c.h.b16 %v36
    %v117 = vunpack.c.l.b16 %v37
    %v118 = vunpack.c.h.b16 %v37
    %v119 = vunpack.c.l.b16 %v38
    %v120 = vunpack.c.h.b16 %v38
    %v121 = vunpack.c.l.b16 %v39
    %v122 = vunpack.c.h.b16 %v39
    %v123 = vunpack.c.l.b16 %v40
    %v124 = vunpack.c.h.b16 %v40
    %v125 = vunpack.c.l.b16 %v41
    %v126 = vunpack.c.h.b16 %v41
    %v127 = vunpack.c.l.b16 %v42
    %v128 = vunpack.c.h.b16 %v42
    %v129 = vunpack.c.l.b16 %v43
    %v130 = vunpack.c.h.b16 %v43
    %v131 = vunpack.c.l.b16 %v44
    %v132 = vunpack.c.h.b16 %v44
    %v133 = vunpack.c.l.b16 %v45
    %v134 = vunpack.c.h.b16 %v45
    %v135 = vunpack.c.l.b16 %v46
    %v136 = vunpack.c.h.b16 %v46
    %v137 = vunpack.c.l.b16 %v47
    %v138 = vunpack.c.h.b16 %v47
    %v139 = vunpack.c.l.b16 %v48
    %v140 = vunpack.c.h.b16 %v48
    %v141 = vunpack.c.l.b16 %v49
    %v142 = vunpack.c.h.b16 %v49
    %v143 = vunpack.c.l.b16 %v50
    %v144 = vunpack.c.h.b16 %v50
    %v145 = vunpack.c.l.b16 %v51
    %v146 = vunpack.c.h.b16 %v51
    %v147 = vunpack.c.l.b16 %v52
    %v148 = vunpack.c.h.b16 %v52
    %v149 = vunpack.c.l.b16 %v53
    %v150 = vunpack.c.h.b16 %v53
    %v151 = vunpack.c.l.b16 %v54
    %v152 = vunpack.c.h.b16 %v54
    %v153 = vunpack.c.l.b16 %v55
    %v154 = vunpack.c.h.b16 %v55
    %v155 = vunpack.c.l.b16 %v56
    %v156 = vunpack.c.h.b16 %v56
    %v157 = vunpack.c.l.b16 %v57
    %v158 = vunpack.c.h.b16 %v57
    %v159 = vunpack.c.l.b16 %v58
    %v160 = vunpack.c.h.b16 %v58
    %v161 = vunpack.c.l.b16 %v59
    %v162 = vunpack.c.h.b16 %v59
    %v163 = vunpack.c.l.b16 %v60
    %v164 = vunpack.c.h.b16 %v60
    %v165 = vunpack.c.l.b16 %v61
    %v166 = vunpack.c.h.b16 %v61
    %v167 = vunpack.c.l.b16 %v62
    %v168 = vunpack.c.h.b16 %v62
    %v169 = vpack.c.b16 %v107, %v105
    %v170 = vpack.c.b16 %v108, %v106
    %v171 = vpack.c.b16 %v111, %v109
    %v172 = vpack.c.b16 %v112, %v110
    %v173 = vpack.c.b16 %v115, %v113
    %v174 = vpack.c.b16 %v116, %v114
    %v175 = vpack.c.b16 %v119, %v117
    %v176 = vpack.c.b16 %v120, %v118
    %v177 = vpack.c.b16 %v123, %v121
    %v178 = vpack.c.b16 %v124, %v122
    %v179 = vpack.c.b16 %v127, %v125
    %v180 = vpack.c.b16 %v128, %v126
    %v181 = vpack.c.b16 %v131, %v129
    %v182 = vpack.c.b16 %v132, %v130
    %v183 = vpack.c.b16 %v135, %v133
    %v184 = vpack.c.b16 %v136, %v134
    %v185 = vpack.c.b16 %v139, %v137
    %v186 = vpack.c.b16 %v140, %v138
    %v187 = vpack.c.b16 %v143, %v141
    %v188 = vpack.c.b16 %v144, %v142
    %v189 = vpack.c.b16 %v147, %v145
    %v190 = vpack.c.b16 %v148, %v146
    %v191 = vpack.c.b16 %v151, %v149
    %v192 = vpack.c.b16 %v152, %v150
    %v193 = vpack.c.b16 %v155, %v153
    %v194 = vpack.c.b16 %v156, %v154
    %v195 = vpack.c.b16 %v159, %v157
    %v196 = vpack.c.b16 %v160, %v158
    %v197 = vpack.c.b16 %v163, %v161
    %v198 = vpack.c.b16 %v164, %v162
    %v199 = vpack.c.b16 %v167, %v165
    %v200 = vpack.c.b16 %v168, %v166
    %233 = vmatprep.subr.bf16.mxu0 %v184
    %234 = vmatpush1.bf16.msra.mxu0 %v183
    %235 = vmatprep.subr.bf16.mxu0 %v182
    %236 = vmatpush1.bf16.msra.mxu0 %v181
    %237 = vmatprep.subr.bf16.mxu0 %v180
    %238 = vmatpush1.bf16.msra.mxu0 %v179
    %239 = vmatprep.subr.bf16.mxu0 %v178
    %240 = vmatpush1.bf16.msra.mxu0 %v177
    %241 = vmatprep.subr.bf16.mxu0 %v176
    %242 = vmatpush1.bf16.msra.mxu0 %v175
    %243 = vmatprep.subr.bf16.mxu0 %v174
    %244 = vmatpush1.bf16.msra.mxu0 %v173
    %245 = vmatprep.subr.bf16.mxu0 %v172
    %246 = vmatpush1.bf16.msra.mxu0 %v171
    %247 = vmatprep.subr.bf16.mxu0 %v170
    %248 = vmatpush1.bf16.msra.mxu0 %v169
    %249 = vmatprep.subr.bf16.mxu0 %v200
    %250 = vmatpush2.bf16.msra.mxu0 %v199
    %251 = vmatprep.subr.bf16.mxu0 %v198
    %252 = vmatpush2.bf16.msra.mxu0 %v197
    %253 = vmatprep.subr.bf16.mxu0 %v196
    %254 = vmatpush2.bf16.msra.mxu0 %v195
    %255 = vmatprep.subr.bf16.mxu0 %v194
    %256 = vmatpush2.bf16.msra.mxu0 %v193
    %257 = vmatprep.subr.bf16.mxu0 %v192
    %258 = vmatpush2.bf16.msra.mxu0 %v191
    %259 = vmatprep.subr.bf16.mxu0 %v190
    %260 = vmatpush2.bf16.msra.mxu0 %v189
    %261 = vmatprep.subr.bf16.mxu0 %v188
    %262 = vmatpush2.bf16.msra.mxu0 %v187
    %263 = vmatprep.subr.bf16.mxu0 %v186
    %264 = vmatpush2.bf16.msra.mxu0 %v185
    %265 = vmatprep.mubr.bf16.mxu0 %v70
    %266 = vmatmul.mubr.bf16.gmra.mxu0 %v69
    %v267 = vpop.f32.mrf.mxu0
    %v268 = vadd.f32 0.0, %v267
    %v269 = vpop.f32.mrf.mxu0
    %v270 = vadd.f32 0.0, %v269
    %v271 = vpop.f32.mrf.mxu0
    %v272 = vadd.f32 0.0, %v271
    %v273 = vpop.f32.mrf.mxu0
    %v274 = vadd.f32 0.0, %v273
    %275 = vdwg.mxu0
    %v276 = vmax.f32 %v268, -1.0
    %v277 = vmax.f32 %v270, -1.0
    %v278 = vmax.f32 %v272, -1.0
    %v279 = vmax.f32 %v274, -1.0
    %v280 = vmin.f32 %v276, 1.0
    %v281 = vmin.f32 %v277, 1.0
    %v282 = vmin.f32 %v278, 1.0
    %v283 = vmin.f32 %v279, 1.0
    %v284 = vmul.f32 %v280, %v280
    %v285 = vmul.f32 %v281, %v281
    %v286 = vmul.f32 %v282, %v282
    %v287 = vmul.f32 %v283, %v283
    %v288 = vsub.f32 1.0, %v284
    %v289 = vsub.f32 1.0, %v285
    %v290 = vsub.f32 1.0, %v286
    %v291 = vsub.f32 1.0, %v287
    %v292 = vmax.f32 %v288, 0.0
    %v293 = vmax.f32 %v289, 0.0
    %v294 = vmax.f32 %v290, 0.0
    %v295 = vmax.f32 %v291, 0.0
    %v296 = vrsqrt.pop %v292
    %v297 = vmul.f32 %v292, %v296
    %vm298 = vcmp.eq.f32.partialorder %v292, inf
    %v299 = vsel %vm298, %v292, %v297
    %vm300 = vcmp.eq.f32.partialorder %v292, 0.0
    %v301 = vand.u32 %v292, 2147483648
    %v302 = vsel %vm300, %v301, %v299
    %v303 = vrsqrt.pop %v293
    %v304 = vmul.f32 %v293, %v303
    %vm305 = vcmp.eq.f32.partialorder %v293, inf
    %v306 = vsel %vm305, %v293, %v304
    %vm307 = vcmp.eq.f32.partialorder %v293, 0.0
    %v308 = vand.u32 %v293, 2147483648
    %v309 = vsel %vm307, %v308, %v306
    %v310 = vrsqrt.pop %v294
    %v311 = vmul.f32 %v294, %v310
    %vm312 = vcmp.eq.f32.partialorder %v294, inf
    %v313 = vsel %vm312, %v294, %v311
    %vm314 = vcmp.eq.f32.partialorder %v294, 0.0
    %v315 = vand.u32 %v294, 2147483648
    %v316 = vsel %vm314, %v315, %v313
    %v317 = vrsqrt.pop %v295
    %v318 = vmul.f32 %v295, %v317
    %vm319 = vcmp.eq.f32.partialorder %v295, inf
    %v320 = vsel %vm319, %v295, %v318
    %vm321 = vcmp.eq.f32.partialorder %v295, 0.0
    %v322 = vand.u32 %v295, 2147483648
    %v323 = vsel %vm321, %v322, %v320
    %v324 = vmul.f32 %v280, 56.165283
    %v325 = vmul.f32 %v281, 56.165283
    %v326 = vmul.f32 %v282, 56.165283
    %v327 = vmul.f32 %v283, 56.165283
    %v328 = vmul.f32 %v302, 30.683235
    %v329 = vmul.f32 %v309, 30.683235
    %v330 = vmul.f32 %v316, 30.683235
    %v331 = vmul.f32 %v323, 30.683235
    %v332 = vsub.f32 %v324, %v328
    %v333 = vsub.f32 %v325, %v329
    %v334 = vsub.f32 %v326, %v330
    %v335 = vsub.f32 %v327, %v331
    %v336 = vmul.f32 %v280, 64.0
    %v337 = vmul.f32 %v281, 64.0
    %v338 = vmul.f32 %v282, 64.0
    %v339 = vmul.f32 %v283, 64.0
    %v340 = vld [vmem:[%s0] sm:$0xff]
    %v341 = vld [vmem:[%s0 + $0x8] sm:$0xff]
    %s342 = smul.u32 0, 256
    %v343 = vstv %s342
    %v344 = vsub.s32 %v340, %v343
    %v345 = vsub.s32 %v341, %v343
    %v346 = vlaneseq
    %v347 = vand.u32 %v346, 127
    %v348 = vadd.s32 %v347, 128
    %349 = vset.pattern.permute.xlu0 0
    %350 = vperm.xlu0 %349, %v344
    %v351 = vpop.permute.xlu0 %350
    %352 = vset.pattern.permute.xlu0 0
    %353 = vperm.xlu0 %352, %v345
    %v354 = vpop.permute.xlu0 %353
    %vm355 = vcmp.eq.s32.totalorder %v347, %v351
    %vm356 = vcmp.eq.s32.totalorder %v348, %v351
    %vm357 = vcmp.eq.s32.totalorder %v347, %v354
    %vm358 = vcmp.eq.s32.totalorder %v348, %v354
    %v359 = vsel %vm355, %v332, %v336
    %v360 = vsel %vm356, %v333, %v337
    %v361 = vsel %vm357, %v334, %v338
    %v362 = vsel %vm358, %v335, %v339
    %363 = vst [vmem:[#allocation5] sm:$0xff] %v359
    %364 = vst [vmem:[#allocation5 + $0x8] sm:$0xff] %v360
    %365 = vst [vmem:[#allocation5 + $0x10] sm:$0xff] %v361
    %366 = vst [vmem:[#allocation5 + $0x18] sm:$0xff] %v362
    // Predicated region
    $region18: #{tpu_custom_call.1} parent=1 // pred_check
      _
    $region19: #{tpu_custom_call.1} parent=1 // pred_check_branch
      %368 = sbr.rel (0) target = $region21
    $region20: #{tpu_custom_call.1} parent=1 // pred_region
      %s370 = ssub.s32 512, 512
      %371 = vsyncadd [#allocation4], %s370
      %s372 = sshll.u32 [#allocation5], 4
      %s373 = int_to_ptr.vmem [resolvable:$true] %s372
      %378 = dma.vmem_to_hbm [thread:$0]  %s373, 512, %s3, [#allocation4], 256, 256, 16
    $region21: #{tpu_custom_call.1} parent=1 // pred_fallthru
      _
    // Predicated region
    $region22: #{tpu_custom_call.1} parent=1 // pred_check
      _
    $region23: #{tpu_custom_call.1} parent=1 // pred_check_branch
      %380 = sbr.rel (0) target = $region25
    $region24: #{tpu_custom_call.1} parent=1 // pred_region
      %381 = dma.done [#allocation4], 512
    $region25: #{tpu_custom_call.1} parent=1 // pred_fallthru
      _
    %382 = vsyncpa [#allocation3], 1
    %383 = vsyncpa [#allocation4], 1

</llo_original>
